<compile_context>
chip_gen: v7x
topology: tpu7x:2x2x1
jax: 0.10.0
libtpu: 0.0.40
codegen_flags: <defaults>
</compile_context>

<pallas_src>
import jax
import jax.numpy as jnp
from jax.experimental import pallas as pl
from jax.experimental.pallas import tpu as pltpu


def _link_predictor_kernel(xi_ref, xj_ref, si_ref, sj_ref,
                           w0a_ref, w0b_ref, b0_ref,
                           w1_ref, b1_ref,
                           w2_ref, b2_ref,
                           o_ref):
    """One tile_n-row tile of the 3-layer MLP link predictor."""
    # Fused concat: cat([x_i, se_i]) * cat([x_j, se_j]) == [x_i*x_j, se_i*se_j].
    hx = xi_ref[...] * xj_ref[...]                      # (tile_n, FEAT)
    hs = si_ref[...] * sj_ref[...]                      # (tile_n, SE)

    # Layer 0: split Linear + ReLU (MXU, f32 accumulate).
    h = (jnp.dot(hx, w0a_ref[...], preferred_element_type=jnp.float32)
         + jnp.dot(hs, w0b_ref[...], preferred_element_type=jnp.float32)
         + b0_ref[...])
    h = jnp.maximum(h, 0.0)                             # (tile_n, HID)

    # Layer 1: Linear + ReLU.
    h = jnp.dot(h, w1_ref[...], preferred_element_type=jnp.float32) + b1_ref[...]
    h = jnp.maximum(h, 0.0)                             # (tile_n, HID)

    # Output layer (out_channels == 1): w2 is stored as a (HID, 1) column so
    # the contraction is a plain matmul -- no transpose of the big activation
    # can be materialized.  b2 arrives as an SMEM scalar.
    y = jnp.dot(h, w2_ref[...], preferred_element_type=jnp.float32) + b2_ref[0, 0]
    o_ref[...] = jax.nn.sigmoid(y).astype(o_ref.dtype)  # (tile_n, 1)


def _lane_pad(d):
    return pl.cdiv(d, 128) * 128


def link_predictor_forward(x_i, x_j, se_i, se_j, params, *, tile_n=None):
    """LinkPredictor forward.  Returns sigmoid scores of shape (n_edges, 1)."""
    n, feat = x_i.shape
    se = se_i.shape[1]
    hid = params["w1"].shape[0]

    # ---- VMEM-aware tile sizing (per-generation via get_tpu_info) ----------
    try:
        vmem_cap = int(pltpu.get_tpu_info().vmem_capacity_bytes)
    except Exception:
        vmem_cap = 64 * 1024 * 1024          # conservative: v7x per-core VMEM

    f32 = 4
    # Per-row working set: 4 double-buffered edge streams + double-buffered
    # output block + ~2 activation-sized temporaries (lane-padded to 128).
    per_row = f32 * (4 * (_lane_pad(feat) + _lane_pad(se)) + 2 * 128
                     + 2 * _lane_pad(hid))
    # VMEM-resident weights/biases (the pipeline double-buffers them).
    weight_bytes = 2 * f32 * ((feat + se + hid) * _lane_pad(hid)
                              + 2 * 8 * _lane_pad(hid) + hid * 128)
    budget = int(vmem_cap * 0.55)
    tile_cap = max((budget - weight_bytes) // per_row, 256)
    tile_cap = min((tile_cap // 256) * 256, 8192)
    if tile_n is None:
        tile_n = tile_cap
    # Keep >= ~4 grid steps on large batches (megacore sharding) and shrink to
    # an 8-row-aligned single tile for tiny batches.
    tile_n = min(int(tile_n),
                 pl.cdiv(max(n // 4, 1), 256) * 256,
                 pl.cdiv(n, 8) * 8)
    tile_n = max(tile_n, 8)

    grid = (pl.cdiv(n, tile_n),)
    footprint = weight_bytes + per_row * tile_n
    vmem_limit = int(min(vmem_cap * 0.85, max(32 * 1024 * 1024, 2 * footprint)))

    def edge_spec(d):
        return pl.BlockSpec((tile_n, d), lambda i: (i, 0))

    def resident_spec(shape):
        return pl.BlockSpec(shape, lambda i: (0,) * len(shape))

    # Advisory cost estimate for the XLA scheduler around this custom call.
    flops = n * (2 * hid * (feat + se) + 2 * hid * hid + 2 * hid
                 + (feat + se) + 3 * hid + 1)
    bytes_accessed = f32 * (2 * n * (feat + se)                    # edge inputs
                            + (feat + se + hid) * hid + 3 * hid + 1  # weights
                            + n)                                   # output
    cost = pl.CostEstimate(flops=flops, transcendentals=n,
                           bytes_accessed=bytes_accessed)

    return pl.pallas_call(
        _link_predictor_kernel,
        out_shape=jax.ShapeDtypeStruct((n, 1), jnp.float32),
        grid=grid,
        in_specs=[
            edge_spec(feat), edge_spec(feat),       # x_i, x_j  (tiled over edges)
            edge_spec(se), edge_spec(se),           # se_i, se_j
            resident_spec((feat, hid)),             # w0a (VMEM-resident)
            resident_spec((se, hid)),               # w0b
            resident_spec((1, hid)),                # b0
            resident_spec((hid, hid)),              # w1
            resident_spec((1, hid)),                # b1
            resident_spec((hid, 1)),                # w2 column
            pl.BlockSpec(memory_space=pltpu.MemorySpace.SMEM),   # b2 scalar
        ],
        out_specs=pl.BlockSpec((tile_n, 1), lambda i: (i, 0)),
        compiler_params=pltpu.CompilerParams(
            dimension_semantics=("parallel",),      # shard tiles across TCs
            vmem_limit_bytes=vmem_limit),
        cost_estimate=cost,
    )(x_i, x_j, se_i, se_j,
      params["w0a"], params["w0b"], params["b0"],
      params["w1"], params["b1"],
      params["w2"], params["b2"])


def init_params(key, feat_dim, se_dim, hidden, out_channels=1):
    """nn.Linear-style init.

    W0 is stored pre-split into its node-feature / structural-embedding row
    blocks in (in, out) layout; W2 is stored as the (hidden, 1) column the
    kernel right-multiplies by.  Biases are 2-D for broadcast; b2 is (1, 1).
    """
    assert out_channels == 1, "kernel assumes out_channels == 1"
    in_channels = feat_dim + se_dim
    k = jax.random.split(key, 6)

    def unif(kk, shape, fan_in):
        bound = float(fan_in) ** -0.5
        return jax.random.uniform(kk, shape, jnp.float32, -bound, bound)

    w0 = unif(k[0], (in_channels, hidden), in_channels)
    b0 = unif(k[1], (1, hidden), in_channels)
    w1 = unif(k[2], (hidden, hidden), hidden)
    b1 = unif(k[3], (1, hidden), hidden)
    w2 = unif(k[4], (hidden, 1), hidden)        # lins[-1].weight.T
    b2 = unif(k[5], (1, 1), hidden)
    return {"w0a": w0[:feat_dim], "w0b": w0[feat_dim:], "b0": b0,
            "w1": w1, "b1": b1, "w2": w2, "b2": b2}


if __name__ == "__main__":
    # Small shapes consistent with the module: 8 edges, node-feature dim 16,
    # structural-embedding dim 16 (in_channels = 32), hidden = 32, out = 1,
    # num_layers = 3.
    N, FEAT, SE, HID, OUT = 8, 16, 16, 32, 1

    key = jax.random.PRNGKey(0)
    k_xi, k_xj, k_si, k_sj, k_p = jax.random.split(key, 5)

    x_i = jax.random.normal(k_xi, (N, FEAT), jnp.float32)
    x_j = jax.random.normal(k_xj, (N, FEAT), jnp.float32)
    se_i = jax.random.normal(k_si, (N, SE), jnp.float32)
    se_j = jax.random.normal(k_sj, (N, SE), jnp.float32)

    params = init_params(k_p, FEAT, SE, HID, OUT)

    out = link_predictor_forward(x_i, x_j, se_i, se_j, params)
    out = jax.block_until_ready(out)

    # Pure-JAX reference (concat form, identical math).
    def ref(x_i, x_j, se_i, se_j, p):
        xi = jnp.concatenate([x_i, se_i], -1)
        xj = jnp.concatenate([x_j, se_j], -1)
        x = xi * xj
        w0 = jnp.concatenate([p["w0a"], p["w0b"]], axis=0)   # (IN, HID)
        x = jnp.maximum(x @ w0 + p["b0"], 0.0)
        x = jnp.maximum(x @ p["w1"] + p["b1"], 0.0)
        return jax.nn.sigmoid(x @ p["w2"] + p["b2"])

    expected = ref(x_i, x_j, se_i, se_j, params)
    assert out.shape == (N, OUT), out.shape
    assert jnp.allclose(out, expected, atol=2e-5, rtol=2e-5), (
        float(jnp.max(jnp.abs(out - expected))))

    print("KERNEL_OK")
</pallas_src>

<mosaic_0001>
module attributes {stable_mosaic.version = 11 : i64} {
  func.func @_link_predictor_kernel(%arg0: i32, %arg1: memref<8x16xf32, #tpu.memory_space<vmem>>, %arg2: memref<8x16xf32, #tpu.memory_space<vmem>>, %arg3: memref<8x16xf32, #tpu.memory_space<vmem>>, %arg4: memref<8x16xf32, #tpu.memory_space<vmem>>, %arg5: memref<16x32xf32, #tpu.memory_space<vmem>>, %arg6: memref<16x32xf32, #tpu.memory_space<vmem>>, %arg7: memref<1x32xf32, #tpu.memory_space<vmem>>, %arg8: memref<32x32xf32, #tpu.memory_space<vmem>>, %arg9: memref<1x32xf32, #tpu.memory_space<vmem>>, %arg10: memref<32x1xf32, #tpu.memory_space<vmem>>, %arg11: memref<1x1xf32, #tpu.memory_space<smem>>, %arg12: memref<8x1xf32, #tpu.memory_space<vmem>>) attributes {dimension_semantics = [#tpu.dimension_semantics<parallel>], iteration_bounds = array<i64: 1>, scalar_prefetch = 0 : i64, scratch_operands = 0 : i64, tpu.core_type = #tpu.core_type<tc>, window_params = [{transform_indices = @transform_0, window_bounds = array<i64: 8, 16>}, {transform_indices = @transform_1, window_bounds = array<i64: 8, 16>}, {transform_indices = @transform_2, window_bounds = array<i64: 8, 16>}, {transform_indices = @transform_3, window_bounds = array<i64: 8, 16>}, {pipeline_mode = #tpu.pipeline_mode<synchronous>, transform_indices = @transform_4, window_bounds = array<i64: 16, 32>}, {pipeline_mode = #tpu.pipeline_mode<synchronous>, transform_indices = @transform_5, window_bounds = array<i64: 16, 32>}, {pipeline_mode = #tpu.pipeline_mode<synchronous>, transform_indices = @transform_6, window_bounds = array<i64: 1, 32>}, {pipeline_mode = #tpu.pipeline_mode<synchronous>, transform_indices = @transform_7, window_bounds = array<i64: 32, 32>}, {pipeline_mode = #tpu.pipeline_mode<synchronous>, transform_indices = @transform_8, window_bounds = array<i64: 1, 32>}, {pipeline_mode = #tpu.pipeline_mode<synchronous>, transform_indices = @transform_9, window_bounds = array<i64: 32, 1>}, {transform_indices = @transform_10, window_bounds = array<i64: 1, 1>}, {transform_indices = @transform_11, window_bounds = array<i64: 8, 1>}]} {
    %c0 = arith.constant 0 : index
    %c0_0 = arith.constant 0 : index
    %0 = vector.load %arg1[%c0, %c0_0] : memref<8x16xf32, #tpu.memory_space<vmem>>, vector<8x16xf32>
    %c0_1 = arith.constant 0 : index
    %c0_2 = arith.constant 0 : index
    %1 = vector.load %arg2[%c0_1, %c0_2] : memref<8x16xf32, #tpu.memory_space<vmem>>, vector<8x16xf32>
    %2 = arith.mulf %0, %1 : vector<8x16xf32>
    %c0_3 = arith.constant 0 : index
    %c0_4 = arith.constant 0 : index
    %3 = vector.load %arg3[%c0_3, %c0_4] : memref<8x16xf32, #tpu.memory_space<vmem>>, vector<8x16xf32>
    %c0_5 = arith.constant 0 : index
    %c0_6 = arith.constant 0 : index
    %4 = vector.load %arg4[%c0_5, %c0_6] : memref<8x16xf32, #tpu.memory_space<vmem>>, vector<8x16xf32>
    %5 = arith.mulf %3, %4 : vector<8x16xf32>
    %c0_7 = arith.constant 0 : index
    %c0_8 = arith.constant 0 : index
    %6 = vector.load %arg5[%c0_7, %c0_8] : memref<16x32xf32, #tpu.memory_space<vmem>>, vector<16x32xf32>
    %cst = arith.constant dense<0.000000e+00> : vector<8x32xf32>
    %7 = tpu.matmul %2, %6, %cst {dimension_numbers = #tpu.dot_dimension_numbers<[1], [0], [0], [1], [0, 0, 1, 1], [], []>} : vector<8x16xf32>, vector<16x32xf32>, vector<8x32xf32> -> vector<8x32xf32>
    %c0_9 = arith.constant 0 : index
    %c0_10 = arith.constant 0 : index
    %8 = vector.load %arg6[%c0_9, %c0_10] : memref<16x32xf32, #tpu.memory_space<vmem>>, vector<16x32xf32>
    %cst_11 = arith.constant dense<0.000000e+00> : vector<8x32xf32>
    %9 = tpu.matmul %5, %8, %cst_11 {dimension_numbers = #tpu.dot_dimension_numbers<[1], [0], [0], [1], [0, 0, 1, 1], [], []>} : vector<8x16xf32>, vector<16x32xf32>, vector<8x32xf32> -> vector<8x32xf32>
    %10 = arith.addf %7, %9 : vector<8x32xf32>
    %c0_12 = arith.constant 0 : index
    %c0_13 = arith.constant 0 : index
    %11 = vector.load %arg7[%c0_12, %c0_13] : memref<1x32xf32, #tpu.memory_space<vmem>>, vector<1x32xf32>
    %12 = vector.broadcast %11 : vector<1x32xf32> to vector<8x32xf32>
    %13 = arith.addf %10, %12 : vector<8x32xf32>
    %cst_14 = arith.constant 0.000000e+00 : f32
    %14 = vector.broadcast %cst_14 : f32 to vector<8x32xf32>
    %15 = arith.maximumf %13, %14 : vector<8x32xf32>
    %c0_15 = arith.constant 0 : index
    %c0_16 = arith.constant 0 : index
    %16 = vector.load %arg8[%c0_15, %c0_16] : memref<32x32xf32, #tpu.memory_space<vmem>>, vector<32x32xf32>
    %cst_17 = arith.constant dense<0.000000e+00> : vector<8x32xf32>
    %17 = tpu.matmul %15, %16, %cst_17 {dimension_numbers = #tpu.dot_dimension_numbers<[1], [0], [0], [1], [0, 0, 1, 1], [], []>} : vector<8x32xf32>, vector<32x32xf32>, vector<8x32xf32> -> vector<8x32xf32>
    %c0_18 = arith.constant 0 : index
    %c0_19 = arith.constant 0 : index
    %18 = vector.load %arg9[%c0_18, %c0_19] : memref<1x32xf32, #tpu.memory_space<vmem>>, vector<1x32xf32>
    %19 = vector.broadcast %18 : vector<1x32xf32> to vector<8x32xf32>
    %20 = arith.addf %17, %19 : vector<8x32xf32>
    %cst_20 = arith.constant 0.000000e+00 : f32
    %21 = vector.broadcast %cst_20 : f32 to vector<8x32xf32>
    %22 = arith.maximumf %20, %21 : vector<8x32xf32>
    %c0_21 = arith.constant 0 : index
    %c0_22 = arith.constant 0 : index
    %23 = vector.load %arg10[%c0_21, %c0_22] : memref<32x1xf32, #tpu.memory_space<vmem>>, vector<32x1xf32>
    %cst_23 = arith.constant dense<0.000000e+00> : vector<8x1xf32>
    %24 = tpu.matmul %22, %23, %cst_23 {dimension_numbers = #tpu.dot_dimension_numbers<[1], [0], [0], [1], [0, 0, 1, 1], [], []>} : vector<8x32xf32>, vector<32x1xf32>, vector<8x1xf32> -> vector<8x1xf32>
    %c0_24 = arith.constant 0 : index
    %c0_25 = arith.constant 0 : index
    %25 = memref.load %arg11[%c0_24, %c0_25] : memref<1x1xf32, #tpu.memory_space<smem>>
    %26 = vector.broadcast %25 : f32 to vector<8x1xf32>
    %27 = arith.addf %24, %26 : vector<8x1xf32>
    %28 = arith.negf %27 : vector<8x1xf32>
    %29 = math.exp %28 : vector<8x1xf32>
    %cst_26 = arith.constant 1.000000e+00 : f32
    %30 = vector.broadcast %cst_26 : f32 to vector<8x1xf32>
    %31 = arith.addf %30, %29 : vector<8x1xf32>
    %32 = arith.divf %30, %31 : vector<8x1xf32>
    %c0_27 = arith.constant 0 : index
    %c0_28 = arith.constant 0 : index
    %33 = vector.load %arg12[%c0_27, %c0_28] : memref<8x1xf32, #tpu.memory_space<vmem>>, vector<8x1xf32>
    tpu.vector_store %arg12[%c0_27, %c0_28], %32 {strides = array<i32>} : memref<8x1xf32, #tpu.memory_space<vmem>>, vector<8x1xf32>,
    return
  }
  func.func @transform_0(%arg0: i32) -> (i32, i32) {
    %c0_i32 = arith.constant 0 : i32
    %c0_i32_0 = arith.constant 0 : i32
    return %arg0, %c0_i32 : i32, i32
  }
  func.func @transform_1(%arg0: i32) -> (i32, i32) {
    %c0_i32 = arith.constant 0 : i32
    %c0_i32_0 = arith.constant 0 : i32
    return %arg0, %c0_i32 : i32, i32
  }
  func.func @transform_2(%arg0: i32) -> (i32, i32) {
    %c0_i32 = arith.constant 0 : i32
    %c0_i32_0 = arith.constant 0 : i32
    return %arg0, %c0_i32 : i32, i32
  }
  func.func @transform_3(%arg0: i32) -> (i32, i32) {
    %c0_i32 = arith.constant 0 : i32
    %c0_i32_0 = arith.constant 0 : i32
    return %arg0, %c0_i32 : i32, i32
  }
  func.func @transform_4(%arg0: i32) -> (i32, i32) {
    %c0_i32 = arith.constant 0 : i32
    %c0_i32_0 = arith.constant 0 : i32
    %c0_i32_1 = arith.constant 0 : i32
    return %c0_i32, %c0_i32_0 : i32, i32
  }
  func.func @transform_5(%arg0: i32) -> (i32, i32) {
    %c0_i32 = arith.constant 0 : i32
    %c0_i32_0 = arith.constant 0 : i32
    %c0_i32_1 = arith.constant 0 : i32
    return %c0_i32, %c0_i32_0 : i32, i32
  }
  func.func @transform_6(%arg0: i32) -> (i32, i32) {
    %c0_i32 = arith.constant 0 : i32
    %c0_i32_0 = arith.constant 0 : i32
    %c0_i32_1 = arith.constant 0 : i32
    return %c0_i32, %c0_i32_0 : i32, i32
  }
  func.func @transform_7(%arg0: i32) -> (i32, i32) {
    %c0_i32 = arith.constant 0 : i32
    %c0_i32_0 = arith.constant 0 : i32
    %c0_i32_1 = arith.constant 0 : i32
    return %c0_i32, %c0_i32_0 : i32, i32
  }
  func.func @transform_8(%arg0: i32) -> (i32, i32) {
    %c0_i32 = arith.constant 0 : i32
    %c0_i32_0 = arith.constant 0 : i32
    %c0_i32_1 = arith.constant 0 : i32
    return %c0_i32, %c0_i32_0 : i32, i32
  }
  func.func @transform_9(%arg0: i32) -> (i32, i32) {
    %c0_i32 = arith.constant 0 : i32
    %c0_i32_0 = arith.constant 0 : i32
    %c0_i32_1 = arith.constant 0 : i32
    return %c0_i32, %c0_i32_0 : i32, i32
  }
  func.func @transform_10(%arg0: i32) -> (i32, i32) {
    %c0_i32 = arith.constant 0 : i32
    %c0_i32_0 = arith.constant 0 : i32
    %c0_i32_1 = arith.constant 0 : i32
    return %c0_i32, %c0_i32_0 : i32, i32
  }
  func.func @transform_11(%arg0: i32) -> (i32, i32) {
    %c0_i32 = arith.constant 0 : i32
    %c0_i32_0 = arith.constant 0 : i32
    return %arg0, %c0_i32 : i32, i32
  }
}

</mosaic_0001>

<llo_original>
// kernel: tpu_custom_call.1
$region0: #{tpu_custom_call.1}
  #allocation0 [shape = 'u32[]', space=smem, size = 0x4, offset = 0x4, fixed_abs, tag = 'smem constant byte address 0x4 - core index']
  #allocation1 [shape = 'u32[144,128]{1,0:T(1,128)}', space=vmem, size = 0x12000, scoped, tag = 'internal scratch']
  #allocation2 [shape = 'f32[1,1]{1,0:T(1,128)S(6)}', space=smem, size = 0x200, scoped, tag = 'scoped memory for tpu_custom_call.1']
  %s0 = inlined_call_operand.vmem [shape: f32[8,16], index: 0, kind: input, shape index: {}]
  %s1 = inlined_call_operand.hbm [shape: f32[8,16], index: 1, kind: input, shape index: {}]
  %s2 = inlined_call_operand.hbm [shape: f32[8,16], index: 2, kind: input, shape index: {}]
  %s3 = inlined_call_operand.hbm [shape: f32[8,16], index: 3, kind: input, shape index: {}]
  %s4 = inlined_call_operand.vmem [shape: f32[16,32], index: 4, kind: input, shape index: {}]
  %s5 = inlined_call_operand.hbm [shape: f32[16,32], index: 5, kind: input, shape index: {}]
  %s6 = inlined_call_operand.vmem [shape: f32[1,32], index: 6, kind: input, shape index: {}]
  %s7 = inlined_call_operand.vmem [shape: f32[32,32], index: 7, kind: input, shape index: {}]
  %s8 = inlined_call_operand.vmem [shape: f32[1,32], index: 8, kind: input, shape index: {}]
  %s9 = inlined_call_operand.vmem [shape: f32[32,1], index: 9, kind: input, shape index: {}]
  %s10 = inlined_call_operand.<no memory space> [shape: f32[1,1], index: 10, kind: input, shape index: {}]
  %s11 = inlined_call_operand.vmem [shape: f32[8,1], index: 11, kind: output, shape index: {}]
  %s12 = sld [smem:[#allocation0]]
  $region70: #{tpu_custom_call.1} parent=0
    _
  %s14 = ssub.s32 1, %s12
  %s15 = scalar_select 0, %s14, %s12
  %16 = sst [smem:[#allocation2]] %s10
  $region1: #{tpu_custom_call.1} parent=0
    #allocation3 [shape = 'u8[4096]{0}', space=vmem, size = 0x1000, scoped, tag = 'input window, operand 1, single buffered']
    #allocation4 [shape = 's32[1]{0}', space=sflag, size = 0x4, scoped, tag = 'scoped memory for tpu_custom_call.1']
    #allocation5 [shape = 'u8[4096]{0}', space=vmem, size = 0x1000, scoped, tag = 'input window, operand 2, single buffered']
    #allocation6 [shape = 's32[1]{0}', space=sflag, size = 0x4, scoped, tag = 'scoped memory for tpu_custom_call.1']
    #allocation7 [shape = 'u8[4096]{0}', space=vmem, size = 0x1000, scoped, tag = 'input window, operand 3, single buffered']
    #allocation8 [shape = 'u8[8192]{0}', space=vmem, size = 0x2000, scoped, tag = 'input window, operand 5, single buffered']
    #allocation9 [shape = 's32[1]{0}', space=sflag, size = 0x4, scoped, tag = 'scoped memory for tpu_custom_call.1']
    %17 = vsyncpa [#allocation4], 0
    %18 = vsyncpa [#allocation6], 0
    %19 = vsyncpa [#allocation9], 0
    // Predicated region
    $region2: #{tpu_custom_call.1} parent=1 // pred_check
      _
    $region3: #{tpu_custom_call.1} parent=1 // pred_check_branch
      %21 = sbr.rel (0) target = $region5
    $region4: #{tpu_custom_call.1} parent=1 // pred_region
      _
    $region5: #{tpu_custom_call.1} parent=1 // pred_fallthru
      _
    // Predicated region
    $region6: #{tpu_custom_call.1} parent=1 // pred_check
      _
    $region7: #{tpu_custom_call.1} parent=1 // pred_check_branch
      %23 = sbr.rel (0) target = $region9
    $region8: #{tpu_custom_call.1} parent=1 // pred_region
      %s25 = ssub.s32 128, 128
      %26 = vsyncadd [#allocation4], %s25
      %s28 = sshll.u32 [#allocation3], 4
      %s29 = int_to_ptr.vmem [resolvable:$true] %s28
      %31 = dma.hbm_to_vmem [thread:$0]  %s1, 128, %s29, [#allocation4]
    $region9: #{tpu_custom_call.1} parent=1 // pred_fallthru
      _
    // Predicated region
    $region10: #{tpu_custom_call.1} parent=1 // pred_check
      _
    $region11: #{tpu_custom_call.1} parent=1 // pred_check_branch
      %33 = sbr.rel (0) target = $region13
    $region12: #{tpu_custom_call.1} parent=1 // pred_region
      %s35 = ssub.s32 128, 128
      %36 = vsyncadd [#allocation6], %s35
      %s38 = sshll.u32 [#allocation5], 4
      %s39 = int_to_ptr.vmem [resolvable:$true] %s38
      %41 = dma.hbm_to_vmem [thread:$0]  %s2, 128, %s39, [#allocation6]
    $region13: #{tpu_custom_call.1} parent=1 // pred_fallthru
      _
    // Predicated region
    $region14: #{tpu_custom_call.1} parent=1 // pred_check
      _
    $region15: #{tpu_custom_call.1} parent=1 // pred_check_branch
      %43 = sbr.rel (0) target = $region17
    $region16: #{tpu_custom_call.1} parent=1 // pred_region
      %s45 = ssub.s32 128, 128
      %46 = vsyncadd [#allocation6], %s45
      %s48 = sshll.u32 [#allocation7], 4
      %s49 = int_to_ptr.vmem [resolvable:$true] %s48
      %51 = dma.hbm_to_vmem [thread:$0]  %s3, 128, %s49, [#allocation6]
    $region17: #{tpu_custom_call.1} parent=1 // pred_fallthru
      _
    // Predicated region
    $region18: #{tpu_custom_call.1} parent=1 // pred_check
      _
    $region19: #{tpu_custom_call.1} parent=1 // pred_check_branch
      %53 = sbr.rel (0) target = $region21
    $region20: #{tpu_custom_call.1} parent=1 // pred_region
      _
    $region21: #{tpu_custom_call.1} parent=1 // pred_fallthru
      _
    // Predicated region
    $region22: #{tpu_custom_call.1} parent=1 // pred_check
      _
    $region23: #{tpu_custom_call.1} parent=1 // pred_check_branch
      %55 = sbr.rel (0) target = $region25
    $region24: #{tpu_custom_call.1} parent=1 // pred_region
      %s57 = ssub.s32 256, 256
      %58 = vsyncadd [#allocation9], %s57
      %s59 = sshll.u32 [#allocation8], 4
      %s60 = int_to_ptr.vmem [resolvable:$true] %s59
      %65 = dma.hbm_to_vmem [thread:$0]  %s5, 256, %s60, [#allocation9], 128, 128, 8
    $region25: #{tpu_custom_call.1} parent=1 // pred_fallthru
      _
    // Predicated region
    $region26: #{tpu_custom_call.1} parent=1 // pred_check
      _
    $region27: #{tpu_custom_call.1} parent=1 // pred_check_branch
      %67 = sbr.rel (0) target = $region29
    $region28: #{tpu_custom_call.1} parent=1 // pred_region
      _
    $region29: #{tpu_custom_call.1} parent=1 // pred_fallthru
      _
    // Predicated region
    $region30: #{tpu_custom_call.1} parent=1 // pred_check
      _
    $region31: #{tpu_custom_call.1} parent=1 // pred_check_branch
      %69 = sbr.rel (0) target = $region33
    $region32: #{tpu_custom_call.1} parent=1 // pred_region
      _
    $region33: #{tpu_custom_call.1} parent=1 // pred_fallthru
      _
    // Predicated region
    $region34: #{tpu_custom_call.1} parent=1 // pred_check
      _
    $region35: #{tpu_custom_call.1} parent=1 // pred_check_branch
      %71 = sbr.rel (0) target = $region37
    $region36: #{tpu_custom_call.1} parent=1 // pred_region
      _
    $region37: #{tpu_custom_call.1} parent=1 // pred_fallthru
      _
    // Predicated region
    $region38: #{tpu_custom_call.1} parent=1 // pred_check
      _
    $region39: #{tpu_custom_call.1} parent=1 // pred_check_branch
      %73 = sbr.rel (0) target = $region41
    $region40: #{tpu_custom_call.1} parent=1 // pred_region
      _
    $region41: #{tpu_custom_call.1} parent=1 // pred_fallthru
      _
    // Predicated region
    $region42: #{tpu_custom_call.1} parent=1 // pred_check
      _
    $region43: #{tpu_custom_call.1} parent=1 // pred_check_branch
      %75 = sbr.rel (0) target = $region45
    $region44: #{tpu_custom_call.1} parent=1 // pred_region
      _
    $region45: #{tpu_custom_call.1} parent=1 // pred_fallthru
      _
    // Predicated region
    $region46: #{tpu_custom_call.1} parent=1 // pred_check
      _
    $region47: #{tpu_custom_call.1} parent=1 // pred_check_branch
      %77 = sbr.rel (0) target = $region49
    $region48: #{tpu_custom_call.1} parent=1 // pred_region
      %78 = dma.done [#allocation4], 128
    $region49: #{tpu_custom_call.1} parent=1 // pred_fallthru
      _
    // Predicated region
    $region50: #{tpu_custom_call.1} parent=1 // pred_check
      _
    $region51: #{tpu_custom_call.1} parent=1 // pred_check_branch
      %80 = sbr.rel (0) target = $region53
    $region52: #{tpu_custom_call.1} parent=1 // pred_region
      %81 = dma.done [#allocation6], 128
    $region53: #{tpu_custom_call.1} parent=1 // pred_fallthru
      _
    // Predicated region
    $region54: #{tpu_custom_call.1} parent=1 // pred_check
      _
    $region55: #{tpu_custom_call.1} parent=1 // pred_check_branch
      %83 = sbr.rel (0) target = $region57
    $region56: #{tpu_custom_call.1} parent=1 // pred_region
      %84 = dma.done [#allocation6], 128
    $region57: #{tpu_custom_call.1} parent=1 // pred_fallthru
      _
    // Predicated region
    $region58: #{tpu_custom_call.1} parent=1 // pred_check
      _
    $region59: #{tpu_custom_call.1} parent=1 // pred_check_branch
      %86 = sbr.rel (0) target = $region61
    $region60: #{tpu_custom_call.1} parent=1 // pred_region
      %87 = dma.done [#allocation9], 256
    $region61: #{tpu_custom_call.1} parent=1 // pred_fallthru
      _
    %v88 = vld [vmem:[%s0] sm:$0xff]
    %v89 = vld [vmem:[#allocation3] sm:$0xff]
    %v90 = vmul.f32 %v88, %v89
    %v91 = vld [vmem:[#allocation5] sm:$0xff]
    %v92 = vld [vmem:[#allocation7] sm:$0xff]
    %v93 = vmul.f32 %v91, %v92
    %v94 = vld [vmem:[%s4] sm:$0xff]
    %v95 = vld [vmem:[%s4 + $0x8] sm:$0xff]
    %v96 = vld [vmem:[#allocation8] sm:$0xff]
    %v97 = vld [vmem:[#allocation8 + $0x8] sm:$0xff]
    %vm98 = vcmask 130048
    %v100 = vsel %vm98, %v93, 0
    %102 = vmatprep.subr.mxu0 0.0
    %103 = vmatpush1.msra.mxu0 %v96
    %104 = vmatprep.subr.mxu0 0.0
    %105 = vmatpush1.msra.mxu0 %v97
    %106 = vmatprep.subr.mxu0 0.0
    %107 = vmatpush1.msra.mxu0 0.0
    %108 = vmatprep.subr.mxu0 0.0
    %109 = vmatpush1.msra.mxu0 0.0
    %110 = vmatprep.subr.mxu0 0.0
    %111 = vmatpush1.msra.mxu0 0.0
    %112 = vmatprep.subr.mxu0 0.0
    %113 = vmatpush1.msra.mxu0 0.0
    %114 = vmatprep.subr.mxu0 0.0
    %115 = vmatpush1.msra.mxu0 0.0
    %116 = vmatprep.subr.mxu0 0.0
    %117 = vmatpush1.msra.mxu0 0.0
    %118 = vmatprep.subr.mxu0 0.0
    %119 = vmatpush1.msra.mxu0 0.0
    %120 = vmatprep.subr.mxu0 0.0
    %121 = vmatpush1.msra.mxu0 0.0
    %122 = vmatprep.subr.mxu0 0.0
    %123 = vmatpush1.msra.mxu0 0.0
    %124 = vmatprep.subr.mxu0 0.0
    %125 = vmatpush1.msra.mxu0 0.0
    %126 = vmatprep.subr.mxu0 0.0
    %127 = vmatpush1.msra.mxu0 0.0
    %128 = vmatprep.subr.mxu0 0.0
    %129 = vmatpush1.msra.mxu0 0.0
    %130 = vmatprep.subr.mxu0 0.0
    %131 = vmatpush1.msra.mxu0 0.0
    %132 = vmatprep.subr.mxu0 0.0
    %133 = vmatpush1.msra.mxu0 0.0
    %134 = vmatprep.subr.mxu0 0.0
    %135 = vmatpush1.msra.mxu0 0.0
    %136 = vmatprep.subr.mxu0 0.0
    %137 = vmatpush1.msra.mxu0 0.0
    %138 = vmatprep.subr.mxu0 0.0
    %139 = vmatpush1.msra.mxu0 0.0
    %140 = vmatprep.subr.mxu0 0.0
    %141 = vmatpush1.msra.mxu0 0.0
    %142 = vmatprep.subr.mxu0 0.0
    %143 = vmatpush1.msra.mxu0 0.0
    %144 = vmatprep.subr.mxu0 0.0
    %145 = vmatpush1.msra.mxu0 0.0
    %146 = vmatprep.subr.mxu0 0.0
    %147 = vmatpush1.msra.mxu0 0.0
    %148 = vmatprep.subr.mxu0 0.0
    %149 = vmatpush1.msra.mxu0 0.0
    %150 = vmatprep.subr.mxu0 0.0
    %151 = vmatpush1.msra.mxu0 0.0
    %152 = vmatprep.subr.mxu0 0.0
    %153 = vmatpush1.msra.mxu0 0.0
    %154 = vmatprep.subr.mxu0 0.0
    %155 = vmatpush1.msra.mxu0 0.0
    %156 = vmatprep.subr.mxu0 0.0
    %157 = vmatpush1.msra.mxu0 0.0
    %158 = vmatprep.subr.mxu0 0.0
    %159 = vmatpush1.msra.mxu0 0.0
    %160 = vmatprep.subr.mxu0 0.0
    %161 = vmatpush1.msra.mxu0 0.0
    %162 = vmatprep.subr.mxu0 0.0
    %163 = vmatpush1.msra.mxu0 0.0
    %164 = vmatprep.subr.mxu0 0.0
    %165 = vmatpush1.msra.mxu0 0.0
    %166 = vmatprep.mubr.f32.mxu0 0.0
    %167 = vmatmul.mubr.f32.gmra.mrb[0].mxu0 %v100
    %v168 = vpop.f32.mrb[0].mxu0
    %v169 = vadd.f32 0.0, %v168
    %v170 = vpop.f32.mrb[0].mxu0
    %171 = vdwg.mxu0
    %v173 = vsel %vm98, %v90, 0
    %175 = vmatprep.subr.mxu0 0.0
    %176 = vmatpush1.msra.mxu0 %v94
    %177 = vmatprep.subr.mxu0 0.0
    %178 = vmatpush1.msra.mxu0 %v95
    %179 = vmatprep.subr.mxu0 0.0
    %180 = vmatpush1.msra.mxu0 0.0
    %181 = vmatprep.subr.mxu0 0.0
    %182 = vmatpush1.msra.mxu0 0.0
    %183 = vmatprep.subr.mxu0 0.0
    %184 = vmatpush1.msra.mxu0 0.0
    %185 = vmatprep.subr.mxu0 0.0
    %186 = vmatpush1.msra.mxu0 0.0
    %187 = vmatprep.subr.mxu0 0.0
    %188 = vmatpush1.msra.mxu0 0.0
    %189 = vmatprep.subr.mxu0 0.0
    %190 = vmatpush1.msra.mxu0 0.0
    %191 = vmatprep.subr.mxu0 0.0
    %192 = vmatpush1.msra.mxu0 0.0
    %193 = vmatprep.subr.mxu0 0.0
    %194 = vmatpush1.msra.mxu0 0.0
    %195 = vmatprep.subr.mxu0 0.0
    %196 = vmatpush1.msra.mxu0 0.0
    %197 = vmatprep.subr.mxu0 0.0
    %198 = vmatpush1.msra.mxu0 0.0
    %199 = vmatprep.subr.mxu0 0.0
    %200 = vmatpush1.msra.mxu0 0.0
    %201 = vmatprep.subr.mxu0 0.0
    %202 = vmatpush1.msra.mxu0 0.0
    %203 = vmatprep.subr.mxu0 0.0
    %204 = vmatpush1.msra.mxu0 0.0
    %205 = vmatprep.subr.mxu0 0.0
    %206 = vmatpush1.msra.mxu0 0.0
    %207 = vmatprep.subr.mxu0 0.0
    %208 = vmatpush1.msra.mxu0 0.0
    %209 = vmatprep.subr.mxu0 0.0
    %210 = vmatpush1.msra.mxu0 0.0
    %211 = vmatprep.subr.mxu0 0.0
    %212 = vmatpush1.msra.mxu0 0.0
    %213 = vmatprep.subr.mxu0 0.0
    %214 = vmatpush1.msra.mxu0 0.0
    %215 = vmatprep.subr.mxu0 0.0
    %216 = vmatpush1.msra.mxu0 0.0
    %217 = vmatprep.subr.mxu0 0.0
    %218 = vmatpush1.msra.mxu0 0.0
    %219 = vmatprep.subr.mxu0 0.0
    %220 = vmatpush1.msra.mxu0 0.0
    %221 = vmatprep.subr.mxu0 0.0
    %222 = vmatpush1.msra.mxu0 0.0
    %223 = vmatprep.subr.mxu0 0.0
    %224 = vmatpush1.msra.mxu0 0.0
    %225 = vmatprep.subr.mxu0 0.0
    %226 = vmatpush1.msra.mxu0 0.0
    %227 = vmatprep.subr.mxu0 0.0
    %228 = vmatpush1.msra.mxu0 0.0
    %229 = vmatprep.subr.mxu0 0.0
    %230 = vmatpush1.msra.mxu0 0.0
    %231 = vmatprep.subr.mxu0 0.0
    %232 = vmatpush1.msra.mxu0 0.0
    %233 = vmatprep.subr.mxu0 0.0
    %234 = vmatpush1.msra.mxu0 0.0
    %235 = vmatprep.subr.mxu0 0.0
    %236 = vmatpush1.msra.mxu0 0.0
    %237 = vmatprep.subr.mxu0 0.0
    %238 = vmatpush1.msra.mxu0 0.0
    %239 = vmatprep.mubr.f32.mxu0 0.0
    %240 = vmatmul.mubr.f32.gmra.mrb[0].mxu0 %v173
    %v241 = vpop.f32.mrb[0].mxu0
    %v242 = vadd.f32 %v169, %v241
    %v243 = vpop.f32.mrb[0].mxu0
    %244 = vdwg.mxu0
    %v245 = vld [vmem:[%s6] sm:$0x1]
    %v247 = vlaneseq
    %v248 = vshrl.u32 %v247, 7
    %v249 = vsub.s32 0, %v248
    %v250 = vrot.slane %v245, %v249
    %v252 = vadd.f32 %v242, %v250
    %v253 = vmax.f32 %v252, 0.0
    %v254 = vld [vmem:[%s7] sm:$0xff]
    %v255 = vld [vmem:[%s7 + $0x8] sm:$0xff]
    %v256 = vld [vmem:[%s7 + $0x10] sm:$0xff]
    %v257 = vld [vmem:[%s7 + $0x18] sm:$0xff]
    %v258 = vld [vmem:[%s8] sm:$0x1]
    %v260 = vlaneseq
    %v261 = vshrl.u32 %v260, 7
    %v262 = vsub.s32 0, %v261
    %v263 = vrot.slane %v258, %v262
    %vm265 = vcmask 261120
    %v267 = vsel %vm265, %v253, 0
    %269 = vmatprep.subr.mxu0 0.0
    %270 = vmatpush1.msra.mxu0 %v254
    %271 = vmatprep.subr.mxu0 0.0
    %272 = vmatpush1.msra.mxu0 %v255
    %273 = vmatprep.subr.mxu0 0.0
    %274 = vmatpush1.msra.mxu0 %v256
    %275 = vmatprep.subr.mxu0 0.0
    %276 = vmatpush1.msra.mxu0 %v257
    %277 = vmatprep.subr.mxu0 0.0
    %278 = vmatpush1.msra.mxu0 0.0
    %279 = vmatprep.subr.mxu0 0.0
    %280 = vmatpush1.msra.mxu0 0.0
    %281 = vmatprep.subr.mxu0 0.0
    %282 = vmatpush1.msra.mxu0 0.0
    %283 = vmatprep.subr.mxu0 0.0
    %284 = vmatpush1.msra.mxu0 0.0
    %285 = vmatprep.subr.mxu0 0.0
    %286 = vmatpush1.msra.mxu0 0.0
    %287 = vmatprep.subr.mxu0 0.0
    %288 = vmatpush1.msra.mxu0 0.0
    %289 = vmatprep.subr.mxu0 0.0
    %290 = vmatpush1.msra.mxu0 0.0
    %291 = vmatprep.subr.mxu0 0.0
    %292 = vmatpush1.msra.mxu0 0.0
    %293 = vmatprep.subr.mxu0 0.0
    %294 = vmatpush1.msra.mxu0 0.0
    %295 = vmatprep.subr.mxu0 0.0
    %296 = vmatpush1.msra.mxu0 0.0
    %297 = vmatprep.subr.mxu0 0.0
    %298 = vmatpush1.msra.mxu0 0.0
    %299 = vmatprep.subr.mxu0 0.0
    %300 = vmatpush1.msra.mxu0 0.0
    %301 = vmatprep.subr.mxu0 0.0
    %302 = vmatpush1.msra.mxu0 0.0
    %303 = vmatprep.subr.mxu0 0.0
    %304 = vmatpush1.msra.mxu0 0.0
    %305 = vmatprep.subr.mxu0 0.0
    %306 = vmatpush1.msra.mxu0 0.0
    %307 = vmatprep.subr.mxu0 0.0
    %308 = vmatpush1.msra.mxu0 0.0
    %309 = vmatprep.subr.mxu0 0.0
    %310 = vmatpush1.msra.mxu0 0.0
    %311 = vmatprep.subr.mxu0 0.0
    %312 = vmatpush1.msra.mxu0 0.0
    %313 = vmatprep.subr.mxu0 0.0
    %314 = vmatpush1.msra.mxu0 0.0
    %315 = vmatprep.subr.mxu0 0.0
    %316 = vmatpush1.msra.mxu0 0.0
    %317 = vmatprep.subr.mxu0 0.0
    %318 = vmatpush1.msra.mxu0 0.0
    %319 = vmatprep.subr.mxu0 0.0
    %320 = vmatpush1.msra.mxu0 0.0
    %321 = vmatprep.subr.mxu0 0.0
    %322 = vmatpush1.msra.mxu0 0.0
    %323 = vmatprep.subr.mxu0 0.0
    %324 = vmatpush1.msra.mxu0 0.0
    %325 = vmatprep.subr.mxu0 0.0
    %326 = vmatpush1.msra.mxu0 0.0
    %327 = vmatprep.subr.mxu0 0.0
    %328 = vmatpush1.msra.mxu0 0.0
    %329 = vmatprep.subr.mxu0 0.0
    %330 = vmatpush1.msra.mxu0 0.0
    %331 = vmatprep.subr.mxu0 0.0
    %332 = vmatpush1.msra.mxu0 0.0
    %333 = vmatprep.mubr.f32.mxu0 0.0
    %334 = vmatmul.mubr.f32.gmra.mrb[0].mxu0 %v267
    %v335 = vpop.f32.mrb[0].mxu0
    %v336 = vadd.f32 %v263, %v335
    %v337 = vpop.f32.mrb[0].mxu0
    %338 = vdwg.mxu0
    %v339 = vmax.f32 %v336, 0.0
    %v340 = vld [vmem:[%s9] sm:$0xff]
    %v341 = vld [vmem:[%s9 + $0x8] sm:$0xff]
    %v342 = vld [vmem:[%s9 + $0x10] sm:$0xff]
    %v343 = vld [vmem:[%s9 + $0x18] sm:$0xff]
    %s344 = sld [smem:[#allocation2]]
    %v345 = vstv %s344
    %v347 = vsel %vm265, %v339, 0
    %349 = vmatprep.subr.mxu0 0.0
    %350 = vmatpush1.msra.mxu0 %v340
    %351 = vmatprep.subr.mxu0 0.0
    %352 = vmatpush1.msra.mxu0 %v341
    %353 = vmatprep.subr.mxu0 0.0
    %354 = vmatpush1.msra.mxu0 %v342
    %355 = vmatprep.subr.mxu0 0.0
    %356 = vmatpush1.msra.mxu0 %v343
    %357 = vmatprep.subr.mxu0 0.0
    %358 = vmatpush1.msra.mxu0 0.0
    %359 = vmatprep.subr.mxu0 0.0
    %360 = vmatpush1.msra.mxu0 0.0
    %361 = vmatprep.subr.mxu0 0.0
    %362 = vmatpush1.msra.mxu0 0.0
    %363 = vmatprep.subr.mxu0 0.0
    %364 = vmatpush1.msra.mxu0 0.0
    %365 = vmatprep.subr.mxu0 0.0
    %366 = vmatpush1.msra.mxu0 0.0
    %367 = vmatprep.subr.mxu0 0.0
    %368 = vmatpush1.msra.mxu0 0.0
    %369 = vmatprep.subr.mxu0 0.0
    %370 = vmatpush1.msra.mxu0 0.0
    %371 = vmatprep.subr.mxu0 0.0
    %372 = vmatpush1.msra.mxu0 0.0
    %373 = vmatprep.subr.mxu0 0.0
    %374 = vmatpush1.msra.mxu0 0.0
    %375 = vmatprep.subr.mxu0 0.0
    %376 = vmatpush1.msra.mxu0 0.0
    %377 = vmatprep.subr.mxu0 0.0
    %378 = vmatpush1.msra.mxu0 0.0
    %379 = vmatprep.subr.mxu0 0.0
    %380 = vmatpush1.msra.mxu0 0.0
    %381 = vmatprep.subr.mxu0 0.0
    %382 = vmatpush1.msra.mxu0 0.0
    %383 = vmatprep.subr.mxu0 0.0
    %384 = vmatpush1.msra.mxu0 0.0
    %385 = vmatprep.subr.mxu0 0.0
    %386 = vmatpush1.msra.mxu0 0.0
    %387 = vmatprep.subr.mxu0 0.0
    %388 = vmatpush1.msra.mxu0 0.0
    %389 = vmatprep.subr.mxu0 0.0
    %390 = vmatpush1.msra.mxu0 0.0
    %391 = vmatprep.subr.mxu0 0.0
    %392 = vmatpush1.msra.mxu0 0.0
    %393 = vmatprep.subr.mxu0 0.0
    %394 = vmatpush1.msra.mxu0 0.0
    %395 = vmatprep.subr.mxu0 0.0
    %396 = vmatpush1.msra.mxu0 0.0
    %397 = vmatprep.subr.mxu0 0.0
    %398 = vmatpush1.msra.mxu0 0.0
    %399 = vmatprep.subr.mxu0 0.0
    %400 = vmatpush1.msra.mxu0 0.0
    %401 = vmatprep.subr.mxu0 0.0
    %402 = vmatpush1.msra.mxu0 0.0
    %403 = vmatprep.subr.mxu0 0.0
    %404 = vmatpush1.msra.mxu0 0.0
    %405 = vmatprep.subr.mxu0 0.0
    %406 = vmatpush1.msra.mxu0 0.0
    %407 = vmatprep.subr.mxu0 0.0
    %408 = vmatpush1.msra.mxu0 0.0
    %409 = vmatprep.subr.mxu0 0.0
    %410 = vmatpush1.msra.mxu0 0.0
    %411 = vmatprep.subr.mxu0 0.0
    %412 = vmatpush1.msra.mxu0 0.0
    %413 = vmatprep.mubr.f32.mxu0 0.0
    %414 = vmatmul.mubr.f32.gmra.mrb[0].mxu0 %v347
    %v415 = vpop.f32.mrb[0].mxu0
    %v416 = vadd.f32 %v345, %v415
    %v417 = vpop.f32.mrb[0].mxu0
    %418 = vdwg.mxu0
    %v419 = vxor.u32 %v416, 2147483648
    %v420 = vmul.f32 %v419, 1.442695
    %v421 = vpow.pop %v420
    %v422 = vadd.f32 %v421, 1.0
    %v423 = vrcp.pop %v422
    %v424 = vmul.f32 1.0, %v423
    %vm425 = vcmask 7168
    %426 = vst.msk [vmem:[%s11] sm:$0xff] %vm425, %v424
    // Predicated region
    $region62: #{tpu_custom_call.1} parent=1 // pred_check
      _
    $region63: #{tpu_custom_call.1} parent=1 // pred_check_branch
      %428 = sbr.rel (0) target = $region65
    $region64: #{tpu_custom_call.1} parent=1 // pred_region
      _
    $region65: #{tpu_custom_call.1} parent=1 // pred_fallthru
      _
    // Predicated region
    $region66: #{tpu_custom_call.1} parent=1 // pred_check
      _
    $region67: #{tpu_custom_call.1} parent=1 // pred_check_branch
      %430 = sbr.rel (0) target = $region69
    $region68: #{tpu_custom_call.1} parent=1 // pred_region
      _
    $region69: #{tpu_custom_call.1} parent=1 // pred_fallthru
      _
    %431 = vsyncpa [#allocation4], 1
    %432 = vsyncpa [#allocation6], 1
    %433 = vsyncpa [#allocation9], 1

</llo_original>
